<compile_context>
chip_gen: v6e
topology: v6e:2x2x1
jax: 0.10.0
libtpu: 0.0.40
codegen_flags: <defaults>
</compile_context>

<pallas_src>
from functools import partial

import jax
import jax.numpy as jnp
from jax.experimental import pallas as pl
from jax.experimental.pallas import tpu as pltpu

_LANE = 128     # last-dim (lane) granularity
_SUBLANE = 8    # second-to-last-dim (sublane) granularity


def _round_up(n, m):
    return ((n + m - 1) // m) * m


def _pad2(a, rows, cols):
    """Zero-pad a 2-D array up to (rows, cols)."""
    return jnp.pad(a, ((0, rows - a.shape[0]), (0, cols - a.shape[1])))


def _pick_tiling(batch, tm_cap):
    """Pick (tm, n_steps) with tm a multiple of 8 and tm * n_steps >= batch.

    Prefers few, large batch tiles (amortizes per-grid-step overhead) while
    keeping the grid length even and >= 2 so v7x megacore can shard the
    'parallel' batch axis across both TensorCores.  Tiny batches collapse to
    a single step.
    """
    b8 = _round_up(batch, _SUBLANE)
    if b8 <= 2 * _SUBLANE:
        return b8, 1
    n_steps = max(2, pl.cdiv(b8, tm_cap))
    if n_steps % 2:
        n_steps += 1
    tm = _round_up(pl.cdiv(b8, n_steps), _SUBLANE)
    return tm, n_steps


# ---------------------------------------------------------------------------
# Kernels
# ---------------------------------------------------------------------------
def _linear_relu_kernel(x_ref, w_ref, b_ref, o_ref):
    """o = relu(x @ w + b) for one (TM, D_in) batch tile (bf16 in, f32 acc)."""
    y = jnp.dot(x_ref[...], w_ref[...], preferred_element_type=jnp.float32)
    o_ref[...] = jnp.maximum(y + b_ref[...], 0.0).astype(o_ref.dtype)


def _two_layer_relu_kernel(x_ref, w1_ref, b1_ref, w2_ref, b2_ref, o_ref, h_ref):
    """o = relu(relu(x @ w1 + b1) @ w2 + b2).

    The hidden activation is staged in a bf16 VMEM scratch (h_ref) instead of
    being held in vregs across both matmuls, so large batch tiles do not
    force register spills.  The hidden never round-trips through HBM.
    """
    h = jnp.dot(x_ref[...], w1_ref[...], preferred_element_type=jnp.float32)
    h_ref[...] = jnp.maximum(h + b1_ref[...], 0.0).astype(h_ref.dtype)
    y = jnp.dot(h_ref[...], w2_ref[...], preferred_element_type=jnp.float32)
    o_ref[...] = jnp.maximum(y + b2_ref[...], 0.0).astype(o_ref.dtype)


# ---------------------------------------------------------------------------
# pallas_call wrappers (batch-tiled, pipelined)
# ---------------------------------------------------------------------------
_COMPILER_PARAMS = pltpu.CompilerParams(
    dimension_semantics=("parallel",),        # shard batch grid across cores
    vmem_limit_bytes=32 * 1024 * 1024,        # explicit; above v5e's 16 MiB default
)

# Block-invariant inputs (weights/biases): single-buffered so they occupy
# 1x (not 2x) their size in VMEM across grid steps.
_RESIDENT = dict(pipeline_mode=pl.Buffered(1))


def linear_relu(x, w, b, *, tm, out_dtype):
    """x: (B_pad, D_in) bf16, w: (D_in, D_out_pad) bf16, b: (1, D_out_pad) f32."""
    B, d_in = x.shape
    d_out = w.shape[1]
    grid = (B // tm,)
    out_bytes = jnp.dtype(out_dtype).itemsize
    cost = pl.CostEstimate(
        flops=2 * B * d_in * d_out,
        transcendentals=0,
        bytes_accessed=(x.size * 2 + w.size * 2 + b.size * 4
                        + B * d_out * out_bytes),
    )
    return pl.pallas_call(
        _linear_relu_kernel,
        out_shape=jax.ShapeDtypeStruct((B, d_out), out_dtype),
        grid_spec=pltpu.PrefetchScalarGridSpec(
            num_scalar_prefetch=0,
            grid=grid,
            in_specs=[
                pl.BlockSpec((tm, d_in), lambda i: (i, 0)),                 # batch tile
                pl.BlockSpec((d_in, d_out), lambda i: (0, 0), **_RESIDENT),  # resident W
                pl.BlockSpec((1, d_out), lambda i: (0, 0), **_RESIDENT),     # resident b
            ],
            out_specs=pl.BlockSpec((tm, d_out), lambda i: (i, 0)),
        ),
        compiler_params=_COMPILER_PARAMS,
        cost_estimate=cost,
    )(x, w, b)


def two_layer_relu(x, w1, b1, w2, b2, *, tm, out_dtype):
    B, d_in = x.shape
    d_hid = w1.shape[1]
    d_out = w2.shape[1]
    grid = (B // tm,)
    out_bytes = jnp.dtype(out_dtype).itemsize
    cost = pl.CostEstimate(
        flops=2 * B * d_in * d_hid + 2 * B * d_hid * d_out,
        transcendentals=0,
        bytes_accessed=(x.size * 2 + w1.size * 2 + b1.size * 4
                        + w2.size * 2 + b2.size * 4 + B * d_out * out_bytes),
    )
    return pl.pallas_call(
        _two_layer_relu_kernel,
        out_shape=jax.ShapeDtypeStruct((B, d_out), out_dtype),
        grid_spec=pltpu.PrefetchScalarGridSpec(
            num_scalar_prefetch=0,
            grid=grid,
            in_specs=[
                pl.BlockSpec((tm, d_in), lambda i: (i, 0)),
                pl.BlockSpec((d_in, d_hid), lambda i: (0, 0), **_RESIDENT),
                pl.BlockSpec((1, d_hid), lambda i: (0, 0), **_RESIDENT),
                pl.BlockSpec((d_hid, d_out), lambda i: (0, 0), **_RESIDENT),
                pl.BlockSpec((1, d_out), lambda i: (0, 0), **_RESIDENT),
            ],
            out_specs=pl.BlockSpec((tm, d_out), lambda i: (i, 0)),
            # bf16 hidden staged on-chip; never touches HBM.
            scratch_shapes=[pltpu.VMEM((tm, d_hid), jnp.bfloat16)],
        ),
        compiler_params=_COMPILER_PARAMS,
        cost_estimate=cost,
    )(x, w1, b1, w2, b2)


# ---------------------------------------------------------------------------
# Jitted functional forward (fuses the bf16 cast + batch pad into one pass)
# ---------------------------------------------------------------------------
@partial(jax.jit,
         static_argnames=("feature_layer", "d_keep", "tm_cap", "out_dtype"))
def _prosody_forward(x, w1, b1, w2, b2, *, feature_layer, d_keep, tm_cap,
                     out_dtype):
    batch = x.shape[0]
    tm, n_steps = _pick_tiling(batch, tm_cap)
    b_pad = tm * n_steps

    xb = x.astype(jnp.bfloat16)
    if b_pad != batch:
        # Single fused cast+pad (only the batch dim; feature dim is unpadded).
        xb = jnp.pad(xb, ((0, b_pad - batch), (0, 0)))

    if feature_layer == 'fc1':
        y = linear_relu(xb, w1, b1, tm=tm, out_dtype=out_dtype)
    else:  # 'fc2'
        y = two_layer_relu(xb, w1, b1, w2, b2, tm=tm, out_dtype=out_dtype)

    # Slice only when something was actually padded (avoids an extra HBM pass).
    if b_pad != batch or y.shape[1] != d_keep:
        y = y[:batch, :d_keep]
    return y


# ---------------------------------------------------------------------------
# Module port
# ---------------------------------------------------------------------------
class ProsodyFeatureExtractor:
    """JAX/Pallas port of the PyTorch ProsodyFeatureExtractor.

    Holds synthetic, deterministically initialized fc1/fc2 parameters of the
    wrapped "original prosody model" and taps the requested layer.  Weights
    are stored pre-transposed ([D_in, D_out]), with only the OUTPUT feature
    dims zero-padded to a 128-lane multiple (input dim stays unpadded), cast
    to bf16 for the MXU; biases stay f32.
    """

    def __init__(self, d_in, d_hidden, d_out, feature_layer='fc1', seed=0,
                 tm_cap=1024, out_dtype=jnp.float32):
        if feature_layer not in ('fc1', 'fc2'):
            raise ValueError(
                f"Feature layer '{feature_layer}' not found in the ProsodyModel.")
        self.feature_layer_name = feature_layer
        self.d_in, self.d_hidden, self.d_out = d_in, d_hidden, d_out
        self.d_hid_pad = _round_up(d_hidden, _LANE)
        self.d_out_pad = _round_up(d_out, _LANE)
        self.tm_cap = tm_cap
        self.out_dtype = out_dtype

        k = jax.random.PRNGKey(seed)
        k1, k2, k3, k4 = jax.random.split(k, 4)
        # NOTE: scaled-normal init (not PyTorch's Kaiming-uniform); only the
        # forward structure matches the original module, not its exact values.
        w1 = jax.random.normal(k1, (d_in, d_hidden), jnp.float32) / jnp.sqrt(d_in)
        b1 = jax.random.normal(k2, (1, d_hidden), jnp.float32) * 0.1
        w2 = jax.random.normal(k3, (d_hidden, d_out), jnp.float32) / jnp.sqrt(d_hidden)
        b2 = jax.random.normal(k4, (1, d_out), jnp.float32) * 0.1

        # Lane-padded (output dims only), bf16 weights for the MXU; f32 biases.
        # Padding columns of b1/rows of w2 are zero so padded hidden cols are
        # relu(0)=0 and contribute nothing to fc2.
        self.w1 = _pad2(w1, d_in, self.d_hid_pad).astype(jnp.bfloat16)
        self.b1 = _pad2(b1, 1, self.d_hid_pad)
        self.w2 = _pad2(w2, self.d_hid_pad, self.d_out_pad).astype(jnp.bfloat16)
        self.b2 = _pad2(b2, 1, self.d_out_pad)

    def __call__(self, x):
        assert x.ndim == 2 and x.shape[1] == self.d_in
        d_keep = self.d_hidden if self.feature_layer_name == 'fc1' else self.d_out
        return _prosody_forward(
            x, self.w1, self.b1, self.w2, self.b2,
            feature_layer=self.feature_layer_name,
            d_keep=d_keep, tm_cap=self.tm_cap, out_dtype=self.out_dtype)


# ---------------------------------------------------------------------------
# Reference (plain JAX) mirroring the kernel's bf16-operand / f32-accumulate math
# ---------------------------------------------------------------------------
def _ref_forward(fe, x):
    # TODO(synk): the fused fc2 path keeps the hidden in bf16 (MXU operand
    # dtype); the PyTorch original keeps it f32.  The reference mirrors the
    # kernel so self-tests are tight.
    hi = jax.lax.Precision.HIGHEST
    xb = x.astype(jnp.bfloat16).astype(jnp.float32)
    w1 = fe.w1[:fe.d_in, :fe.d_hidden].astype(jnp.float32)
    h = jnp.maximum(jnp.dot(xb, w1, precision=hi) + fe.b1[:, :fe.d_hidden], 0.0)
    if fe.feature_layer_name == 'fc1':
        return h
    w2 = fe.w2[:fe.d_hidden, :fe.d_out].astype(jnp.float32)
    hb = h.astype(jnp.bfloat16).astype(jnp.float32)
    return jnp.maximum(jnp.dot(hb, w2, precision=hi) + fe.b2[:, :fe.d_out], 0.0)


if __name__ == "__main__":
    B, D_IN, D_HID, D_OUT = 256, 96, 64, 48   # non-128 dims exercise padding

    key = jax.random.PRNGKey(0)
    x = jax.random.normal(key, (B, D_IN), jnp.float32)

    # fc1 tap (f32 output, tight tolerance)
    fe1 = ProsodyFeatureExtractor(D_IN, D_HID, D_OUT, feature_layer='fc1')
    out1 = jax.block_until_ready(fe1(x))
    ref1 = _ref_forward(fe1, x)
    assert out1.shape == (B, D_HID)
    assert jnp.allclose(out1, ref1, atol=1e-3, rtol=1e-3), \
        float(jnp.max(jnp.abs(out1 - ref1)))

    # fc2 tap (fused two-layer kernel, f32 output)
    fe2 = ProsodyFeatureExtractor(D_IN, D_HID, D_OUT, feature_layer='fc2')
    out2 = jax.block_until_ready(fe2(x))
    ref2 = _ref_forward(fe2, x)
    assert out2.shape == (B, D_OUT)
    assert jnp.allclose(out2, ref2, atol=1e-3, rtol=1e-3), \
        float(jnp.max(jnp.abs(out2 - ref2)))

    # Ragged / tiny batch path (batch padding + slice-off)
    x_small = jax.random.normal(jax.random.PRNGKey(1), (20, D_IN), jnp.float32)
    out3 = jax.block_until_ready(fe2(x_small))
    ref3 = _ref_forward(fe2, x_small)
    assert out3.shape == (20, D_OUT)
    assert jnp.allclose(out3, ref3, atol=1e-3, rtol=1e-3), \
        float(jnp.max(jnp.abs(out3 - ref3)))

    # Larger batch exercises the big-tile path (grid=2, tm=1024) and the
    # bf16 output option (halved writeback stream).
    x_big = jax.random.normal(jax.random.PRNGKey(2), (2048, D_IN), jnp.float32)
    fe_bf16 = ProsodyFeatureExtractor(D_IN, D_HID, D_OUT, feature_layer='fc2',
                                      out_dtype=jnp.bfloat16)
    out4 = jax.block_until_ready(fe_bf16(x_big))
    ref4 = _ref_forward(fe_bf16, x_big).astype(jnp.bfloat16).astype(jnp.float32)
    assert out4.shape == (2048, D_OUT)
    assert jnp.allclose(out4.astype(jnp.float32), ref4, atol=3e-2, rtol=3e-2), \
        float(jnp.max(jnp.abs(out4.astype(jnp.float32) - ref4)))

    print("KERNEL_OK")
</pallas_src>

<mosaic_0001>
module attributes {stable_mosaic.version = 11 : i64} {
  func.func @_linear_relu_kernel(%arg0: i32, %arg1: memref<128x96xbf16, #tpu.memory_space<vmem>>, %arg2: memref<96x128xbf16, #tpu.memory_space<vmem>>, %arg3: memref<1x128xf32, #tpu.memory_space<vmem>>, %arg4: memref<128x128xf32, #tpu.memory_space<vmem>>) attributes {dimension_semantics = [#tpu.dimension_semantics<parallel>], iteration_bounds = array<i64: 2>, scalar_prefetch = 0 : i64, scratch_operands = 0 : i64, tpu.core_type = #tpu.core_type<tc>, window_params = [{transform_indices = @transform_0, window_bounds = array<i64: 128, 96>}, {pipeline_mode = #tpu.pipeline_mode<synchronous>, transform_indices = @transform_1, window_bounds = array<i64: 96, 128>}, {pipeline_mode = #tpu.pipeline_mode<synchronous>, transform_indices = @transform_2, window_bounds = array<i64: 1, 128>}, {transform_indices = @transform_3, window_bounds = array<i64: 128, 128>}]} {
    %c0 = arith.constant 0 : index
    %c0_0 = arith.constant 0 : index
    %0 = vector.load %arg1[%c0, %c0_0] : memref<128x96xbf16, #tpu.memory_space<vmem>>, vector<128x96xbf16>
    %c0_1 = arith.constant 0 : index
    %c0_2 = arith.constant 0 : index
    %1 = vector.load %arg2[%c0_1, %c0_2] : memref<96x128xbf16, #tpu.memory_space<vmem>>, vector<96x128xbf16>
    %cst = arith.constant dense<0.000000e+00> : vector<128x128xf32>
    %2 = tpu.matmul %0, %1, %cst {dimension_numbers = #tpu.dot_dimension_numbers<[1], [0], [0], [1], [0, 0, 1, 1], [], []>} : vector<128x96xbf16>, vector<96x128xbf16>, vector<128x128xf32> -> vector<128x128xf32>
    %c0_3 = arith.constant 0 : index
    %c0_4 = arith.constant 0 : index
    %3 = vector.load %arg3[%c0_3, %c0_4] : memref<1x128xf32, #tpu.memory_space<vmem>>, vector<1x128xf32>
    %4 = vector.broadcast %3 : vector<1x128xf32> to vector<128x128xf32>
    %5 = arith.addf %2, %4 : vector<128x128xf32>
    %cst_5 = arith.constant 0.000000e+00 : f32
    %6 = vector.broadcast %cst_5 : f32 to vector<128x128xf32>
    %7 = arith.maximumf %5, %6 : vector<128x128xf32>
    %c0_6 = arith.constant 0 : index
    %c0_7 = arith.constant 0 : index
    %8 = vector.load %arg4[%c0_6, %c0_7] : memref<128x128xf32, #tpu.memory_space<vmem>>, vector<128x128xf32>
    tpu.vector_store %arg4[%c0_6, %c0_7], %7 {strides = array<i32>} : memref<128x128xf32, #tpu.memory_space<vmem>>, vector<128x128xf32>,
    return
  }
  func.func @transform_0(%arg0: i32) -> (i32, i32) {
    %c0_i32 = arith.constant 0 : i32
    %c0_i32_0 = arith.constant 0 : i32
    return %arg0, %c0_i32 : i32, i32
  }
  func.func @transform_1(%arg0: i32) -> (i32, i32) {
    %c0_i32 = arith.constant 0 : i32
    %c0_i32_0 = arith.constant 0 : i32
    %c0_i32_1 = arith.constant 0 : i32
    return %c0_i32, %c0_i32_0 : i32, i32
  }
  func.func @transform_2(%arg0: i32) -> (i32, i32) {
    %c0_i32 = arith.constant 0 : i32
    %c0_i32_0 = arith.constant 0 : i32
    %c0_i32_1 = arith.constant 0 : i32
    return %c0_i32, %c0_i32_0 : i32, i32
  }
  func.func @transform_3(%arg0: i32) -> (i32, i32) {
    %c0_i32 = arith.constant 0 : i32
    %c0_i32_0 = arith.constant 0 : i32
    return %arg0, %c0_i32 : i32, i32
  }
}

</mosaic_0001>

<llo_original>
// kernel: _prosody_forward.1
$region0: #{_prosody_forward.1}
  #allocation0 [shape = 'u32[]', space=smem, size = 0x4, offset = 0x4, fixed_abs, tag = 'smem constant byte address 0x4 - core index']
  #allocation1 [shape = 'u32[144,128]{1,0:T(1,128)}', space=vmem, size = 0x12000, scoped, tag = 'internal scratch']
  %s0 = inlined_call_operand.vmem [shape: bf16[256,96], index: 0, kind: input, shape index: {}]
  %s1 = inlined_call_operand.vmem [shape: bf16[96,128], index: 1, kind: input, shape index: {}]
  %s2 = inlined_call_operand.vmem [shape: f32[1,128], index: 2, kind: input, shape index: {}]
  %s3 = inlined_call_operand.vmem [shape: f32[256,128], index: 3, kind: output, shape index: {}]
  %s4 = sld [smem:[#allocation0]]
  $region45: #{_prosody_forward.1} parent=0
    _
  %s6 = ssub.s32 1, %s4
  %s7 = scalar_select 0, %s6, %s4
  loop: start=0, step=1, limit=4
  $region2: #{_prosody_forward.1} parent=0 // loop_pre_header
    _
  $region3: #{_prosody_forward.1} parent=0 // loop_header
    %s9 = sphi 0, %s13
    %p10 = scmp.ge.s32.totalorder %s9, 4
    %s19 = sphi 0, %s21
    %s22 = sphi 0, %s19
    %s23 = sphi 0, %s22
    %s39 = sphi 0, %s23
    %s43 = sphi 0, %s43
    %s45 = sphi 0, %s43
    %s46 = sphi 0, %s45
    %s60 = sphi 0, %s46
    %s64 = sphi 0, %s64
    %s66 = sphi 0, %s64
    %s67 = sphi 0, %s66
    %s81 = sphi 0, %s67
    %s87 = sphi 0, %s89
    %s90 = sphi 0, %s87
    %s91 = sphi 0, %s90
    %s107 = sphi 0, %s91
  $region4: #{_prosody_forward.1} parent=0 // loop_header_branch
    %12 = sbr.rel (%p10) target = $region8
  $region5: #{_prosody_forward.1} parent=0 // loop_body
    %s14 = ssub.s32 %s9, 1
    %s15 = ssub.s32 %s9, 2
    %s16 = sadd.s32 %s9, 1
    %s17 = ssub.s32 %s9, %s16
    %p18 = scmp.eq.s32.totalorder %s17, 0
    %s20 = sadd.s32 %s19, 1
    %s21 = scalar_select %p18, %s19, %s20
    %p24 = pneg %p18
    %p25 = scmp.eq.s32.totalorder %s9, 1
    %p26 = por %p24, %p25
    %p27 = scmp.ne.s32.totalorder %s19, %s22
    %p28 = scmp.eq.s32.totalorder %s9, 0
    %p29 = por %p27, %p28
    %p30 = scmp.ne.s32.totalorder %s19, %s22
    %p31 = scmp.eq.s32.totalorder %s14, 1
    %p32 = por %p30, %p31
    %p33 = scmp.ne.s32.totalorder %s22, %s23
    %p34 = scmp.eq.s32.totalorder %s14, 0
    %p35 = por %p33, %p34
    %p36 = scmp.ne.s32.totalorder %s22, %s23
    %p37 = scmp.eq.s32.totalorder %s15, 1
    %p38 = por %p36, %p37
    %p40 = scmp.ne.s32.totalorder %s23, %s39
    %p41 = scmp.eq.s32.totalorder %s15, 0
    %p42 = por %p40, %p41
    %s44 = sadd.s32 %s43, 1
    %p47 = scmp.eq.s32.totalorder %s9, 1
    %p48 = scmp.ne.s32.totalorder %s43, %s45
    %p49 = scmp.eq.s32.totalorder %s9, 0
    %p50 = por %p48, %p49
    %p51 = scmp.ne.s32.totalorder %s43, %s45
    %p52 = scmp.eq.s32.totalorder %s14, 1
    %p53 = por %p51, %p52
    %p54 = scmp.ne.s32.totalorder %s45, %s46
    %p55 = scmp.eq.s32.totalorder %s14, 0
    %p56 = por %p54, %p55
    %p57 = scmp.ne.s32.totalorder %s45, %s46
    %p58 = scmp.eq.s32.totalorder %s15, 1
    %p59 = por %p57, %p58
    %p61 = scmp.ne.s32.totalorder %s46, %s60
    %p62 = scmp.eq.s32.totalorder %s15, 0
    %p63 = por %p61, %p62
    %s65 = sadd.s32 %s64, 1
    %p68 = scmp.eq.s32.totalorder %s9, 1
    %p69 = scmp.ne.s32.totalorder %s64, %s66
    %p70 = scmp.eq.s32.totalorder %s9, 0
    %p71 = por %p69, %p70
    %p72 = scmp.ne.s32.totalorder %s64, %s66
    %p73 = scmp.eq.s32.totalorder %s14, 1
    %p74 = por %p72, %p73
    %p75 = scmp.ne.s32.totalorder %s66, %s67
    %p76 = scmp.eq.s32.totalorder %s14, 0
    %p77 = por %p75, %p76
    %p78 = scmp.ne.s32.totalorder %s66, %s67
    %p79 = scmp.eq.s32.totalorder %s15, 1
    %p80 = por %p78, %p79
    %p82 = scmp.ne.s32.totalorder %s67, %s81
    %p83 = scmp.eq.s32.totalorder %s15, 0
    %p84 = por %p82, %p83
    %s85 = ssub.s32 %s9, %s16
    %p86 = scmp.eq.s32.totalorder %s85, 0
    %s88 = sadd.s32 %s87, 1
    %s89 = scalar_select %p86, %s87, %s88
    %p92 = pneg %p86
    %p93 = scmp.eq.s32.totalorder %s9, 1
    %p94 = por %p92, %p93
    %p95 = scmp.ne.s32.totalorder %s87, %s90
    %p96 = scmp.eq.s32.totalorder %s9, 0
    %p97 = por %p95, %p96
    %p98 = scmp.ne.s32.totalorder %s87, %s90
    %p99 = scmp.eq.s32.totalorder %s14, 1
    %p100 = por %p98, %p99
    %p101 = scmp.ne.s32.totalorder %s90, %s91
    %p102 = scmp.eq.s32.totalorder %s14, 0
    %p103 = por %p101, %p102
    %p104 = scmp.ne.s32.totalorder %s90, %s91
    %p105 = scmp.eq.s32.totalorder %s15, 1
    %p106 = por %p104, %p105
    %p108 = scmp.ne.s32.totalorder %s91, %s107
    %p109 = scmp.eq.s32.totalorder %s15, 0
    %p110 = por %p108, %p109
    %p111 = scmp.le.s32.totalorder 1, %s9
    %p112 = scmp.lt.s32.totalorder %s9, 3
    %p113 = pnand %p111, %p112
    %p114 = pneg %p113
    // Predicated region
    $region9: #{_prosody_forward.1} parent=5 // pred_check
      _
    $region10: #{_prosody_forward.1} parent=5 // pred_check_branch
      %116 = sbr.rel (%p113) target = $region12
    $region11: #{_prosody_forward.1} parent=5 // pred_region
      %s117 = ssub.s32 %s9, 1
      // Predicated region
      $region13: #{_prosody_forward.1} parent=11 // pred_check
        %p118 = pneg %p56
      $region14: #{_prosody_forward.1} parent=11 // pred_check_branch
        %120 = sbr.rel (%p118) target = $region16
      $region15: #{_prosody_forward.1} parent=11 // pred_region
        _
      $region16: #{_prosody_forward.1} parent=11 // pred_fallthru
        _
      // Predicated region
      $region17: #{_prosody_forward.1} parent=11 // pred_check
        %p121 = pneg %p77
      $region18: #{_prosody_forward.1} parent=11 // pred_check_branch
        %123 = sbr.rel (%p121) target = $region20
      $region19: #{_prosody_forward.1} parent=11 // pred_region
        _
      $region20: #{_prosody_forward.1} parent=11 // pred_fallthru
        _
    $region12: #{_prosody_forward.1} parent=5 // pred_fallthru
      _
    %p124 = scmp.lt.s32.totalorder %s9, 2
    // Predicated region
    $region21: #{_prosody_forward.1} parent=5 // pred_check
      %p125 = pneg %p124
    $region22: #{_prosody_forward.1} parent=5 // pred_check_branch
      %127 = sbr.rel (%p125) target = $region24
    $region23: #{_prosody_forward.1} parent=5 // pred_region
      // Predicated region
      $region25: #{_prosody_forward.1} parent=23 // pred_check
        %p128 = pneg %p29
      $region26: #{_prosody_forward.1} parent=23 // pred_check_branch
        %130 = sbr.rel (%p128) target = $region28
      $region27: #{_prosody_forward.1} parent=23 // pred_region
        %s131 = smul.u32 16, %s9
        %p132 = scmp.lt.s32.totalorder %s131, 31
        %s133 = scalar_select %p132, %s131, 31
        %s134 = smul.addr %s133, 4
        %s135 = scalar_lea.vmem %s0, %s134
        %s136 = smul.u32 16, %s9
      $region28: #{_prosody_forward.1} parent=23 // pred_fallthru
        _
    $region24: #{_prosody_forward.1} parent=5 // pred_fallthru
      _
    %p137 = scmp.le.s32.totalorder 1, %s9
    %p138 = scmp.lt.s32.totalorder %s9, 3
    %p139 = pnand %p137, %p138
    %p140 = pneg %p139
    // Predicated region
    $region29: #{_prosody_forward.1} parent=5 // pred_check
      _
    $region30: #{_prosody_forward.1} parent=5 // pred_check_branch
      %142 = sbr.rel (%p139) target = $region32
    $region31: #{_prosody_forward.1} parent=5 // pred_region
      %s143 = ssub.s32 %s9, 1
      %s144 = smul.u32 16, %s14
      %p145 = scmp.lt.s32.totalorder %s144, 31
      %s146 = scalar_select %p145, %s144, 31
      %s147 = smul.addr %s146, 4
      %s148 = scalar_lea.vmem %s0, %s147
      %p149 = pneg %p35
      %p150 = pneg %p32
      %p151 = pneg %p56
      %p152 = pneg %p53
      %p153 = pneg %p77
      %p154 = pneg %p74
      %p155 = pneg %p103
      %p156 = pneg %p100
      %s157 = smul.u32 16, %s14
      %p158 = scmp.lt.s32.totalorder %s157, 31
      %s159 = scalar_select %p158, %s157, 31
      %s160 = smul.addr %s159, 8
      %s161 = scalar_lea.vmem %s3, %s160
      %s162 = smul.u32 16, %s14
      %p163 = scmp.lt.s32.totalorder %s162, 31
      %s164 = scalar_select %p163, %s162, 31
      %s165 = smul.addr %s164, 4
      %s166 = scalar_lea.vmem %s0, %s165
      %s167 = smul.u32 16, %s14
      %s168 = smul.u32 16, %s14
      %p169 = scmp.lt.s32.totalorder %s168, 31
      %s170 = scalar_select %p169, %s168, 31
      %s171 = smul.addr %s170, 8
      %s172 = scalar_lea.vmem %s3, %s171
      %s173 = smul.u32 16, %s14
      %v175 = vld [vmem:[%s166] sm:$0xf]
      %v176 = vld [vmem:[%s166 + $0x4] sm:$0xf]
      %v177 = vld [vmem:[%s166 + $0x8] sm:$0xf]
      %v178 = vld [vmem:[%s166 + $0xc] sm:$0xf]
      %v179 = vld [vmem:[%s166 + $0x10] sm:$0xf]
      %v180 = vld [vmem:[%s166 + $0x14] sm:$0xf]
      %v181 = vld [vmem:[%s166 + $0x18] sm:$0xf]
      %v182 = vld [vmem:[%s166 + $0x1c] sm:$0xf]
      %v183 = vld [vmem:[%s166 + $0x20] sm:$0xf]
      %v184 = vld [vmem:[%s166 + $0x24] sm:$0xf]
      %v185 = vld [vmem:[%s166 + $0x28] sm:$0xf]
      %v186 = vld [vmem:[%s166 + $0x2c] sm:$0xf]
      %v187 = vld [vmem:[%s166 + $0x30] sm:$0xf]
      %v188 = vld [vmem:[%s166 + $0x34] sm:$0xf]
      %v189 = vld [vmem:[%s166 + $0x38] sm:$0xf]
      %v190 = vld [vmem:[%s166 + $0x3c] sm:$0xf]
      %v191 = vld [vmem:[%s1] sm:$0xf]
      %v192 = vld [vmem:[%s1 + $0x4] sm:$0xf]
      %v193 = vld [vmem:[%s1 + $0x8] sm:$0xf]
      %v194 = vld [vmem:[%s1 + $0xc] sm:$0xf]
      %v195 = vld [vmem:[%s1 + $0x10] sm:$0xf]
      %v196 = vld [vmem:[%s1 + $0x14] sm:$0xf]
      %v197 = vld [vmem:[%s1 + $0x18] sm:$0xf]
      %v198 = vld [vmem:[%s1 + $0x1c] sm:$0xf]
      %v199 = vld [vmem:[%s1 + $0x20] sm:$0xf]
      %v200 = vld [vmem:[%s1 + $0x24] sm:$0xf]
      %v201 = vld [vmem:[%s1 + $0x28] sm:$0xf]
      %v202 = vld [vmem:[%s1 + $0x2c] sm:$0xf]
      %v203 = vld [vmem:[%s2] sm:$0x1]
      %v205 = vlaneseq
      %v206 = vshrl.u32 %v205, 7
      %v207 = vsub.s32 0, %v206
      %v208 = vrot.slane %v203, %v207
      %v226 = vunpack.c.l.b16 %v175
      %v227 = vunpack.c.l.b16 %v176
      %v228 = vunpack.c.l.b16 %v177
      %v229 = vunpack.c.l.b16 %v178
      %v230 = vunpack.c.l.b16 %v179
      %v231 = vunpack.c.l.b16 %v180
      %v232 = vunpack.c.l.b16 %v181
      %v233 = vunpack.c.l.b16 %v182
      %v234 = vunpack.c.l.b16 %v183
      %v235 = vunpack.c.l.b16 %v184
      %v236 = vunpack.c.l.b16 %v185
      %v237 = vunpack.c.l.b16 %v186
      %v238 = vunpack.c.l.b16 %v187
      %v239 = vunpack.c.l.b16 %v188
      %v240 = vunpack.c.l.b16 %v189
      %v241 = vunpack.c.l.b16 %v190
      %v242 = vpack.c.b16 %v227, %v226
      %v243 = vpack.c.b16 %v229, %v228
      %v244 = vpack.c.b16 %v231, %v230
      %v245 = vpack.c.b16 %v233, %v232
      %v246 = vpack.c.b16 %v235, %v234
      %v247 = vpack.c.b16 %v237, %v236
      %v248 = vpack.c.b16 %v239, %v238
      %v249 = vpack.c.b16 %v241, %v240
      %v262 = vunpack.c.l.b16 %v191
      %v263 = vunpack.c.l.b16 %v192
      %v264 = vunpack.c.l.b16 %v193
      %v265 = vunpack.c.l.b16 %v194
      %v266 = vunpack.c.l.b16 %v195
      %v267 = vunpack.c.l.b16 %v196
      %v268 = vunpack.c.l.b16 %v197
      %v269 = vunpack.c.l.b16 %v198
      %v270 = vunpack.c.l.b16 %v199
      %v271 = vunpack.c.l.b16 %v200
      %v272 = vunpack.c.l.b16 %v201
      %v273 = vunpack.c.l.b16 %v202
      %v274 = vpack.c.b16 %v263, %v262
      %v275 = vpack.c.b16 %v265, %v264
      %v276 = vpack.c.b16 %v267, %v266
      %v277 = vpack.c.b16 %v269, %v268
      %v278 = vpack.c.b16 %v271, %v270
      %v279 = vpack.c.b16 %v273, %v272
      %vm286 = vcmask 785408
      %v288 = vsel %vm286, %v242, 0
      %v291 = vsel %vm286, %v243, 0
      %v294 = vsel %vm286, %v244, 0
      %v297 = vsel %vm286, %v245, 0
      %v300 = vsel %vm286, %v246, 0
      %v303 = vsel %vm286, %v247, 0
      %v306 = vsel %vm286, %v248, 0
      %v309 = vsel %vm286, %v249, 0
      %311 = vmatprep.subr.bf16.mxu0 0
      %312 = vmatpush1.bf16.msra.mxu0 0
      %313 = vmatprep.subr.bf16.mxu0 0
      %314 = vmatpush1.bf16.msra.mxu0 0
      %315 = vmatprep.subr.bf16.mxu0 0
      %316 = vmatpush1.bf16.msra.mxu0 %v279
      %317 = vmatprep.subr.bf16.mxu0 0
      %318 = vmatpush1.bf16.msra.mxu0 %v278
      %319 = vmatprep.subr.bf16.mxu0 0
      %320 = vmatpush1.bf16.msra.mxu0 %v277
      %321 = vmatprep.subr.bf16.mxu0 0
      %322 = vmatpush1.bf16.msra.mxu0 %v276
      %323 = vmatprep.subr.bf16.mxu0 0
      %324 = vmatpush1.bf16.msra.mxu0 %v275
      %325 = vmatprep.subr.bf16.mxu0 0
      %326 = vmatpush1.bf16.msra.mxu0 %v274
      %327 = vmatprep.subr.bf16.mxu0 0
      %328 = vmatpush2.bf16.msra.mxu0 0
      %329 = vmatprep.subr.bf16.mxu0 0
      %330 = vmatpush2.bf16.msra.mxu0 0
      %331 = vmatprep.subr.bf16.mxu0 0
      %332 = vmatpush2.bf16.msra.mxu0 0
      %333 = vmatprep.subr.bf16.mxu0 0
      %334 = vmatpush2.bf16.msra.mxu0 0
      %335 = vmatprep.subr.bf16.mxu0 0
      %336 = vmatpush2.bf16.msra.mxu0 0
      %337 = vmatprep.subr.bf16.mxu0 0
      %338 = vmatpush2.bf16.msra.mxu0 0
      %339 = vmatprep.subr.bf16.mxu0 0
      %340 = vmatpush2.bf16.msra.mxu0 0
      %341 = vmatprep.subr.bf16.mxu0 0
      %342 = vmatpush2.bf16.msra.mxu0 0
      %343 = vmatprep.mubr.bf16.mxu0 0
      %344 = vmatmul.mubr.bf16.gmra.mxu0 %v288
      %v345 = vpop.f32.mrf.mxu0
      %v346 = vadd.f32 %v208, %v345
      %v347 = vpop.f32.mrf.mxu0
      %v348 = vpop.f32.mrf.mxu0
      %v349 = vadd.f32 %v208, %v348
      %v350 = vpop.f32.mrf.mxu0
      %351 = vmatprep.mubr.bf16.mxu0 0
      %352 = vmatmul.mubr.bf16.gmra.mxu0 %v291
      %v353 = vpop.f32.mrf.mxu0
      %v354 = vadd.f32 %v208, %v353
      %v355 = vpop.f32.mrf.mxu0
      %v356 = vpop.f32.mrf.mxu0
      %v357 = vadd.f32 %v208, %v356
      %v358 = vpop.f32.mrf.mxu0
      %359 = vmatprep.mubr.bf16.mxu0 0
      %360 = vmatmul.mubr.bf16.gmra.mxu0 %v294
      %v361 = vpop.f32.mrf.mxu0
      %v362 = vadd.f32 %v208, %v361
      %v363 = vpop.f32.mrf.mxu0
      %v364 = vpop.f32.mrf.mxu0
      %v365 = vadd.f32 %v208, %v364
      %v366 = vpop.f32.mrf.mxu0
      %367 = vmatprep.mubr.bf16.mxu0 0
      %368 = vmatmul.mubr.bf16.gmra.mxu0 %v297
      %v369 = vpop.f32.mrf.mxu0
      %v370 = vadd.f32 %v208, %v369
      %v371 = vpop.f32.mrf.mxu0
      %v372 = vpop.f32.mrf.mxu0
      %v373 = vadd.f32 %v208, %v372
      %v374 = vpop.f32.mrf.mxu0
      %375 = vmatprep.mubr.bf16.mxu0 0
      %376 = vmatmul.mubr.bf16.gmra.mxu0 %v300
      %v377 = vpop.f32.mrf.mxu0
      %v378 = vadd.f32 %v208, %v377
      %v379 = vpop.f32.mrf.mxu0
      %v380 = vpop.f32.mrf.mxu0
      %v381 = vadd.f32 %v208, %v380
      %v382 = vpop.f32.mrf.mxu0
      %383 = vmatprep.mubr.bf16.mxu0 0
      %384 = vmatmul.mubr.bf16.gmra.mxu0 %v303
      %v385 = vpop.f32.mrf.mxu0
      %v386 = vadd.f32 %v208, %v385
      %v387 = vpop.f32.mrf.mxu0
      %v388 = vpop.f32.mrf.mxu0
      %v389 = vadd.f32 %v208, %v388
      %v390 = vpop.f32.mrf.mxu0
      %391 = vmatprep.mubr.bf16.mxu0 0
      %392 = vmatmul.mubr.bf16.gmra.mxu0 %v306
      %v393 = vpop.f32.mrf.mxu0
      %v394 = vadd.f32 %v208, %v393
      %v395 = vpop.f32.mrf.mxu0
      %v396 = vpop.f32.mrf.mxu0
      %v397 = vadd.f32 %v208, %v396
      %v398 = vpop.f32.mrf.mxu0
      %399 = vmatprep.mubr.bf16.mxu0 0
      %400 = vmatmul.mubr.bf16.gmra.mxu0 %v309
      %v401 = vpop.f32.mrf.mxu0
      %v402 = vadd.f32 %v208, %v401
      %v403 = vpop.f32.mrf.mxu0
      %v404 = vpop.f32.mrf.mxu0
      %v405 = vadd.f32 %v208, %v404
      %v406 = vpop.f32.mrf.mxu0
      %407 = vdwg.mxu0
      %v408 = vmax.f32 %v346, 0.0
      %v409 = vmax.f32 %v349, 0.0
      %v410 = vmax.f32 %v354, 0.0
      %v411 = vmax.f32 %v357, 0.0
      %v412 = vmax.f32 %v362, 0.0
      %v413 = vmax.f32 %v365, 0.0
      %v414 = vmax.f32 %v370, 0.0
      %v415 = vmax.f32 %v373, 0.0
      %v416 = vmax.f32 %v378, 0.0
      %v417 = vmax.f32 %v381, 0.0
      %v418 = vmax.f32 %v386, 0.0
      %v419 = vmax.f32 %v389, 0.0
      %v420 = vmax.f32 %v394, 0.0
      %v421 = vmax.f32 %v397, 0.0
      %v422 = vmax.f32 %v402, 0.0
      %v423 = vmax.f32 %v405, 0.0
      %424 = vst [vmem:[%s172] sm:$0xff] %v408
      %425 = vst [vmem:[%s172 + $0x8] sm:$0xff] %v409
      %426 = vst [vmem:[%s172 + $0x10] sm:$0xff] %v410
      %427 = vst [vmem:[%s172 + $0x18] sm:$0xff] %v411
      %428 = vst [vmem:[%s172 + $0x20] sm:$0xff] %v412
      %429 = vst [vmem:[%s172 + $0x28] sm:$0xff] %v413
      %430 = vst [vmem:[%s172 + $0x30] sm:$0xff] %v414
      %431 = vst [vmem:[%s172 + $0x38] sm:$0xff] %v415
      %432 = vst [vmem:[%s172 + $0x40] sm:$0xff] %v416
      %433 = vst [vmem:[%s172 + $0x48] sm:$0xff] %v417
      %434 = vst [vmem:[%s172 + $0x50] sm:$0xff] %v418
      %435 = vst [vmem:[%s172 + $0x58] sm:$0xff] %v419
      %436 = vst [vmem:[%s172 + $0x60] sm:$0xff] %v420
      %437 = vst [vmem:[%s172 + $0x68] sm:$0xff] %v421
      %438 = vst [vmem:[%s172 + $0x70] sm:$0xff] %v422
      %439 = vst [vmem:[%s172 + $0x78] sm:$0xff] %v423
      %s440 = smul.u32 16, %s14
      %p441 = scmp.lt.s32.totalorder %s440, 31
      %s442 = scalar_select %p441, %s440, 31
      %s443 = smul.addr %s442, 8
      %s444 = scalar_lea.vmem %s3, %s443
      // Predicated region
      $region33: #{_prosody_forward.1} parent=31 // pred_check
        %p445 = pneg %p100
      $region34: #{_prosody_forward.1} parent=31 // pred_check_branch
        %447 = sbr.rel (%p445) target = $region36
      $region35: #{_prosody_forward.1} parent=31 // pred_region
        %s448 = smul.u32 16, %s14
      $region36: #{_prosody_forward.1} parent=31 // pred_fallthru
        _
    $region32: #{_prosody_forward.1} parent=5 // pred_fallthru
      _
    %p449 = scmp.le.s32.totalorder 2, %s9
    // Predicated region
    $region37: #{_prosody_forward.1} parent=5 // pred_check
      %p450 = pneg %p449
    $region38: #{_prosody_forward.1} parent=5 // pred_check_branch
      %452 = sbr.rel (%p450) target = $region40
    $region39: #{_prosody_forward.1} parent=5 // pred_region
      %s453 = ssub.s32 %s9, 2
      // Predicated region
      $region41: #{_prosody_forward.1} parent=39 // pred_check
        %p454 = pneg %p106
      $region42: #{_prosody_forward.1} parent=39 // pred_check_branch
        %456 = sbr.rel (%p454) target = $region44
      $region43: #{_prosody_forward.1} parent=39 // pred_region
        %s457 = smul.u32 16, %s15
        %p458 = scmp.lt.s32.totalorder %s457, 31
        %s459 = scalar_select %p458, %s457, 31
        %s460 = smul.addr %s459, 8
        %s461 = scalar_lea.vmem %s3, %s460
      $region44: #{_prosody_forward.1} parent=39 // pred_fallthru
        _
    $region40: #{_prosody_forward.1} parent=5 // pred_fallthru
      _
  $region6: #{_prosody_forward.1} parent=0 // loop_footer
    %s13 = sadd.s32 1, %s9
  $region7: #{_prosody_forward.1} parent=0 // loop_footer_branch
    %8 = sbr.rel target = $region3
  $region8: #{_prosody_forward.1} parent=0 // loop_exit
    _

</llo_original>
